<compile_context>
chip_gen: v5e
topology: v5e:2x2
jax: 0.10.0
libtpu: 0.0.40
codegen_flags: <defaults>
</compile_context>

<pallas_src>
import functools
import math

import jax
import jax.numpy as jnp
from jax.experimental import pallas as pl
from jax.experimental.pallas import tpu as pltpu

_INV_LN2 = 1.0 / math.log(2.0)


def _entropy_kernel(p_ref, o_ref, acc_ref, *, m_total, tile_m, mask_cols):
    # p_ref:   (tn, tm) block of probabilities (any float dtype)
    # o_ref:   (1, 1, tn) lane-dense per-row entropies for this row block
    # acc_ref: (tn, 1) float32 running sum of p * ln(p) over the m axis
    k = pl.program_id(1)

    @pl.when(k == 0)
    def _init():
        acc_ref[...] = jnp.zeros_like(acc_ref)

    # f32 math in-register (mandatory on v5e: no bf16 VPU/EUP).
    p = p_ref[...].astype(jnp.float32)

    if mask_cols:
        # Ragged m: the last k block reads past column m (unspecified values).
        # Neutralize them with 1.0 (1 * ln(1) == 0 contributes nothing).
        # Emitted only when m % tile_m != 0 (zero cost in the aligned case).
        col = jax.lax.broadcasted_iota(jnp.int32, p.shape, 1)
        p = jnp.where(col < (m_total - k * tile_m), p, 1.0)

    acc_ref[...] += jnp.sum(p * jnp.log(p), axis=1, keepdims=True)

    @pl.when(k == pl.num_programs(1) - 1)
    def _finalize():
        tn = acc_ref.shape[0]
        # Scale / negate once per row (hoisted out of the per-element loop).
        ent = acc_ref[...] * (-_INV_LN2)                      # (tn, 1) f32
        # Lane-dense store: convert the (tn, 1) column of per-row results into
        # (1, 128) rows, 128 rows at a time, via a diagonal mask and a
        # cross-sublane reduction (avoids masked partial stores and a 4-byte
        # strided HBM writeback).
        rows = jax.lax.broadcasted_iota(jnp.int32, (128, 128), 0)
        cols = jax.lax.broadcasted_iota(jnp.int32, (128, 128), 1)
        diag_mask = rows == cols
        for c in range(tn // 128):
            colv = ent[c * 128:(c + 1) * 128, :]              # (128, 1)
            diag = jnp.where(diag_mask, colv, 0.0)            # (128, 128)
            rowv = jnp.sum(diag, axis=0, keepdims=True)       # (1, 128)
            o_ref[0, :, c * 128:(c + 1) * 128] = rowv.astype(o_ref.dtype)


def _round_up(x, k):
    return (x + k - 1) // k * k


def entropy(p, *, tile_n=512, tile_m=2048, vmem_limit_bytes=None):
    """Per-row entropy of an (n, m) batch of probability distributions.

    Returns a vector of shape (n,), equal to (-p * log2(p)).sum(dim=1) of the
    PyTorch `Entropy` module. Accumulation is in float32; output keeps p.dtype.
    """
    n, m = p.shape
    out_dtype = p.dtype

    # Row tile: multiple of 128 (lane-dense output, bf16 sublane packing).
    tile_n = max(128, _round_up(tile_n, 128))
    tile_m = max(128, _round_up(tile_m, 128))
    tn = min(tile_n, _round_up(n, 128))

    # Distribution axis: single block covering all of m if it fits, else
    # 128-aligned K-tiles with in-kernel masking of the ragged edge.
    tm = m if m <= tile_m else tile_m
    mask_cols = (m % tm) != 0

    n_blocks = pl.cdiv(n, tn)
    k_blocks = pl.cdiv(m, tm)

    if vmem_limit_bytes is None:
        itemsize = jnp.dtype(p.dtype).itemsize
        out_isize = jnp.dtype(out_dtype).itemsize
        # double-buffered input block + double-buffered output slab + acc + slack
        needed = 2 * tn * tm * itemsize + 2 * tn * out_isize + tn * 4 + (2 << 20)
        # Default tiles need well under 32 MiB; keep the limit modest so it is
        # also safe on v7x (64 MiB VMEM per TensorCore).
        vmem_limit_bytes = max(needed, 32 << 20)

    kernel = functools.partial(
        _entropy_kernel, m_total=m, tile_m=tm, mask_cols=mask_cols)

    out = pl.pallas_call(
        kernel,
        out_shape=jax.ShapeDtypeStruct((n_blocks, 1, tn), out_dtype),
        grid_spec=pltpu.PrefetchScalarGridSpec(
            num_scalar_prefetch=0,
            grid=(n_blocks, k_blocks),                 # reduction axis last
            in_specs=[pl.BlockSpec((tn, tm), lambda i, k: (i, k))],
            out_specs=pl.BlockSpec((1, 1, tn), lambda i, k: (i, 0, 0)),
            scratch_shapes=[pltpu.VMEM((tn, 1), jnp.float32)],
        ),
        compiler_params=pltpu.CompilerParams(
            dimension_semantics=("parallel", "arbitrary"),
            vmem_limit_bytes=vmem_limit_bytes,
        ),
    )(p)
    return out.reshape(n_blocks * tn)[:n]


def entropy_ref(p):
    # Pure-JAX reference for correctness check.
    return jnp.sum(-p * jnp.log2(p), axis=1)


if __name__ == "__main__":
    key = jax.random.PRNGKey(0)

    # Case 1: small shapes consistent with the module (n samples, m-way rows).
    n, m = 8, 32
    logits = jax.random.normal(key, (n, m), dtype=jnp.float32)
    p = jax.nn.softmax(logits, axis=1)          # valid probability distributions
    out = jax.block_until_ready(entropy(p))
    ref = entropy_ref(p)
    assert out.shape == (n,)
    assert jnp.allclose(out, ref, atol=1e-5, rtol=1e-5), (out, ref)

    # Case 2: exercises row tiling, K-tiling over m, and ragged rows (no pad).
    n2, m2 = 300, 384
    logits2 = jax.random.normal(jax.random.PRNGKey(1), (n2, m2), dtype=jnp.float32)
    p2 = jax.nn.softmax(logits2, axis=1)
    out2 = jax.block_until_ready(entropy(p2, tile_n=128, tile_m=128))
    ref2 = entropy_ref(p2)
    assert out2.shape == (n2,)
    assert jnp.allclose(out2, ref2, atol=1e-5, rtol=1e-5), (out2, ref2)

    # Case 3: ragged reduction axis -> in-kernel column-masking path.
    n3, m3 = 256, 200
    logits3 = jax.random.normal(jax.random.PRNGKey(2), (n3, m3), dtype=jnp.float32)
    p3 = jax.nn.softmax(logits3, axis=1)
    out3 = jax.block_until_ready(entropy(p3, tile_n=128, tile_m=128))
    ref3 = entropy_ref(p3)
    assert out3.shape == (n3,)
    assert jnp.allclose(out3, ref3, atol=1e-5, rtol=1e-5), (out3, ref3)

    print("KERNEL_OK")
</pallas_src>

<mosaic_0001>
module attributes {stable_mosaic.version = 11 : i64} {
  func.func @_entropy_kernel(%arg0: i32, %arg1: i32, %arg2: memref<128x32xf32, #tpu.memory_space<vmem>>, %arg3: memref<1x1x128xf32, #tpu.memory_space<vmem>>, %arg4: memref<128x1xf32, #tpu.memory_space<vmem>>) attributes {dimension_semantics = [#tpu.dimension_semantics<parallel>, #tpu.dimension_semantics<arbitrary>], iteration_bounds = array<i64: 1, 1>, scalar_prefetch = 0 : i64, scratch_operands = 1 : i64, tpu.core_type = #tpu.core_type<tc>, window_params = [{transform_indices = @transform_0, window_bounds = array<i64: 128, 32>}, {transform_indices = @transform_1, window_bounds = array<i64: 1, 1, 128>}]} {
    %c0_i32 = arith.constant 0 : i32
    %0 = arith.cmpi eq, %arg1, %c0_i32 : i32
    %1 = arith.extui %0 : i1 to i32
    %c0_i32_0 = arith.constant 0 : i32
    %2 = arith.cmpi ne, %1, %c0_i32_0 : i32
    scf.if %2 {
      %cst_8 = arith.constant 0.000000e+00 : f32
      %14 = vector.broadcast %cst_8 : f32 to vector<128x1xf32>
      %c0_9 = arith.constant 0 : index
      %c0_10 = arith.constant 0 : index
      %15 = vector.load %arg4[%c0_9, %c0_10] : memref<128x1xf32, #tpu.memory_space<vmem>>, vector<128x1xf32>
      tpu.vector_store %arg4[%c0_9, %c0_10], %14 {strides = array<i32>} : memref<128x1xf32, #tpu.memory_space<vmem>>, vector<128x1xf32>,
    } else {
    }
    %c0 = arith.constant 0 : index
    %c0_1 = arith.constant 0 : index
    %3 = vector.load %arg2[%c0, %c0_1] : memref<128x32xf32, #tpu.memory_space<vmem>>, vector<128x32xf32>
    %c0_2 = arith.constant 0 : index
    %c0_3 = arith.constant 0 : index
    %4 = vector.load %arg4[%c0_2, %c0_3] : memref<128x1xf32, #tpu.memory_space<vmem>>, vector<128x1xf32>
    %5 = math.log %3 : vector<128x32xf32>
    %6 = arith.mulf %3, %5 : vector<128x32xf32>
    %cst = arith.constant dense<0.000000e+00> : vector<128xf32>
    %7 = vector.multi_reduction <add>, %6, %cst [1] : vector<128x32xf32> to vector<128xf32>
    %8 = vector.shape_cast %7 : vector<128xf32> to vector<128x1xf32>
    %9 = arith.addf %4, %8 : vector<128x1xf32>
    %c0_4 = arith.constant 0 : index
    %c0_5 = arith.constant 0 : index
    %10 = vector.load %arg4[%c0_4, %c0_5] : memref<128x1xf32, #tpu.memory_space<vmem>>, vector<128x1xf32>
    tpu.vector_store %arg4[%c0_4, %c0_5], %9 {strides = array<i32>} : memref<128x1xf32, #tpu.memory_space<vmem>>, vector<128x1xf32>,
    %c0_i32_6 = arith.constant 0 : i32
    %11 = arith.cmpi eq, %arg1, %c0_i32_6 : i32
    %12 = arith.extui %11 : i1 to i32
    %c0_i32_7 = arith.constant 0 : i32
    %13 = arith.cmpi ne, %12, %c0_i32_7 : i32
    scf.if %13 {
      %c0_8 = arith.constant 0 : index
      %c0_9 = arith.constant 0 : index
      %14 = vector.load %arg4[%c0_8, %c0_9] : memref<128x1xf32, #tpu.memory_space<vmem>>, vector<128x1xf32>
      %cst_10 = arith.constant -1.44269502 : f32
      %15 = vector.broadcast %cst_10 : f32 to vector<128x1xf32>
      %16 = arith.mulf %14, %15 : vector<128x1xf32>
      %17 = tpu.iota {dimensions = array<i32: 0>} : vector<128x128xi32>
      %18 = tpu.iota {dimensions = array<i32: 1>} : vector<128x128xi32>
      %19 = arith.cmpi eq, %17, %18 : vector<128x128xi32>
      %cst_11 = arith.constant 0.000000e+00 : f32
      %20 = vector.shape_cast %16 : vector<128x1xf32> to vector<128x1xf32>
      %21 = vector.broadcast %20 : vector<128x1xf32> to vector<128x128xf32>
      %22 = vector.broadcast %cst_11 : f32 to vector<128x128xf32>
      %23 = arith.select %19, %21, %22 : vector<128x128xi1>, vector<128x128xf32>
      %cst_12 = arith.constant dense<0.000000e+00> : vector<128xf32>
      %24 = vector.multi_reduction <add>, %23, %cst_12 [0] : vector<128x128xf32> to vector<128xf32>
      %25 = vector.shape_cast %24 : vector<128xf32> to vector<1x128xf32>
      %c0_13 = arith.constant 0 : index
      %c0_14 = arith.constant 0 : index
      %c0_15 = arith.constant 0 : index
      %26 = vector.load %arg3[%c0_13, %c0_14, %c0_15] : memref<1x1x128xf32, #tpu.memory_space<vmem>>, vector<1x1x128xf32>
      %27 = vector.shape_cast %26 : vector<1x1x128xf32> to vector<1x128xf32>
      %28 = vector.shape_cast %25 : vector<1x128xf32> to vector<1x1x128xf32>
      tpu.vector_store %arg3[%c0_13, %c0_14, %c0_15], %28 {strides = array<i32>} : memref<1x1x128xf32, #tpu.memory_space<vmem>>, vector<1x1x128xf32>,
    } else {
    }
    return
  }
  func.func @transform_0(%arg0: i32, %arg1: i32) -> (i32, i32) {
    %c0_i32 = arith.constant 0 : i32
    return %arg0, %arg1 : i32, i32
  }
  func.func @transform_1(%arg0: i32, %arg1: i32) -> (i32, i32, i32) {
    %c0_i32 = arith.constant 0 : i32
    %c0_i32_0 = arith.constant 0 : i32
    %c0_i32_1 = arith.constant 0 : i32
    return %arg0, %c0_i32, %c0_i32_0 : i32, i32, i32
  }
}

</mosaic_0001>

<llo_original>
// kernel: tpu_custom_call.1
$region0: #{tpu_custom_call.1}
  #allocation0 [shape = 'u32[]', space=smem, size = 0x4, offset = 0x4, fixed_abs, tag = 'smem constant byte address 0x4 - core index']
  #allocation1 [shape = 'u32[72,128]{1,0:T(1,128)}', space=vmem, size = 0x9000, scoped, tag = 'internal scratch']
  #allocation2 [shape = 'f32[128,1]{1,0:T(8,128)}', space=vmem, size = 0x10000, scoped, tag = 'scratch operand']
  %s0 = inlined_call_operand.hbm [shape: f32[8,32], index: 0, kind: input, shape index: {}]
  %s1 = inlined_call_operand.hbm [shape: f32[1,1,128], index: 1, kind: output, shape index: {}]
  %s2 = sld [smem:[#allocation0]]
  $region26: #{tpu_custom_call.1} parent=0
    _
  %s4 = ssub.s32 1, %s2
  %s5 = scalar_select 0, %s4, %s2
  $region1: #{tpu_custom_call.1} parent=0
    #allocation3 [shape = 'u8[65536]{0}', space=vmem, size = 0x10000, scoped, tag = 'input window, operand 0, single buffered']
    #allocation4 [shape = 's32[1]{0}', space=sflag, size = 0x4, scoped, tag = 'scoped memory for tpu_custom_call.1']
    #allocation5 [shape = 's32[1]{0}', space=sflag, size = 0x4, scoped, tag = 'scoped memory for tpu_custom_call.1']
    #allocation6 [shape = 'u8[512]{0}', space=vmem, size = 0x400, scoped, tag = 'output window, operand 0, single buffered']
    %6 = vsyncpa [#allocation4], 0
    %7 = vsyncpa [#allocation5], 0
    // Predicated region
    $region2: #{tpu_custom_call.1} parent=1 // pred_check
      _
    $region3: #{tpu_custom_call.1} parent=1 // pred_check_branch
      %9 = sbr.rel (0) target = $region5
    $region4: #{tpu_custom_call.1} parent=1 // pred_region
      %11 = vsyncadd [#allocation4], 1920
      %s12 = sshll.u32 %s0, 4
      %s13 = int_to_ptr.hbm [resolvable:$true] %s12
      %s14 = sshll.u32 [#allocation3], 4
      %s15 = int_to_ptr.vmem [resolvable:$true] %s14
      %20 = dma.hbm_to_vmem [thread:$0]  %s13, 128, %s15, [#allocation4], 128, 128, 8
    $region5: #{tpu_custom_call.1} parent=1 // pred_fallthru
      _
    // Predicated region
    $region6: #{tpu_custom_call.1} parent=1 // pred_check
      _
    $region7: #{tpu_custom_call.1} parent=1 // pred_check_branch
      %22 = sbr.rel (0) target = $region9
    $region8: #{tpu_custom_call.1} parent=1 // pred_region
      %24 = dma.done [#allocation4], 2048
    $region9: #{tpu_custom_call.1} parent=1 // pred_fallthru
      _
    %p25 = scmp.eq.s32.totalorder 0, 0
    // Predicated region
    $region10: #{tpu_custom_call.1} parent=1 // pred_check
      %p26 = pneg %p25
    $region11: #{tpu_custom_call.1} parent=1 // pred_check_branch
      %28 = sbr.rel (%p26) target = $region13
    $region12: #{tpu_custom_call.1} parent=1 // pred_region
      %vm29 = vcmask 7168
      %30 = vst.msk [vmem:[#allocation2] sm:$0xff] %vm29, 0.0
      %31 = vst.msk [vmem:[#allocation2 + $0x8] sm:$0xff] %vm29, 0.0
      %32 = vst.msk [vmem:[#allocation2 + $0x10] sm:$0xff] %vm29, 0.0
      %33 = vst.msk [vmem:[#allocation2 + $0x18] sm:$0xff] %vm29, 0.0
      %34 = vst.msk [vmem:[#allocation2 + $0x20] sm:$0xff] %vm29, 0.0
      %35 = vst.msk [vmem:[#allocation2 + $0x28] sm:$0xff] %vm29, 0.0
      %36 = vst.msk [vmem:[#allocation2 + $0x30] sm:$0xff] %vm29, 0.0
      %37 = vst.msk [vmem:[#allocation2 + $0x38] sm:$0xff] %vm29, 0.0
      %38 = vst.msk [vmem:[#allocation2 + $0x40] sm:$0xff] %vm29, 0.0
      %39 = vst.msk [vmem:[#allocation2 + $0x48] sm:$0xff] %vm29, 0.0
      %40 = vst.msk [vmem:[#allocation2 + $0x50] sm:$0xff] %vm29, 0.0
      %41 = vst.msk [vmem:[#allocation2 + $0x58] sm:$0xff] %vm29, 0.0
      %42 = vst.msk [vmem:[#allocation2 + $0x60] sm:$0xff] %vm29, 0.0
      %43 = vst.msk [vmem:[#allocation2 + $0x68] sm:$0xff] %vm29, 0.0
      %44 = vst.msk [vmem:[#allocation2 + $0x70] sm:$0xff] %vm29, 0.0
      %45 = vst.msk [vmem:[#allocation2 + $0x78] sm:$0xff] %vm29, 0.0
    $region13: #{tpu_custom_call.1} parent=1 // pred_fallthru
      _
    %v46 = vld [vmem:[#allocation3] sm:$0xff]
    %v47 = vld [vmem:[#allocation3 + $0x8] sm:$0xff]
    %v48 = vld [vmem:[#allocation3 + $0x10] sm:$0xff]
    %v49 = vld [vmem:[#allocation3 + $0x18] sm:$0xff]
    %v50 = vld [vmem:[#allocation3 + $0x20] sm:$0xff]
    %v51 = vld [vmem:[#allocation3 + $0x28] sm:$0xff]
    %v52 = vld [vmem:[#allocation3 + $0x30] sm:$0xff]
    %v53 = vld [vmem:[#allocation3 + $0x38] sm:$0xff]
    %v54 = vld [vmem:[#allocation3 + $0x40] sm:$0xff]
    %v55 = vld [vmem:[#allocation3 + $0x48] sm:$0xff]
    %v56 = vld [vmem:[#allocation3 + $0x50] sm:$0xff]
    %v57 = vld [vmem:[#allocation3 + $0x58] sm:$0xff]
    %v58 = vld [vmem:[#allocation3 + $0x60] sm:$0xff]
    %v59 = vld [vmem:[#allocation3 + $0x68] sm:$0xff]
    %v60 = vld [vmem:[#allocation3 + $0x70] sm:$0xff]
    %v61 = vld [vmem:[#allocation3 + $0x78] sm:$0xff]
    %v62 = vld [vmem:[#allocation2] sm:$0xff]
    %v63 = vld [vmem:[#allocation2 + $0x8] sm:$0xff]
    %v64 = vld [vmem:[#allocation2 + $0x10] sm:$0xff]
    %v65 = vld [vmem:[#allocation2 + $0x18] sm:$0xff]
    %v66 = vld [vmem:[#allocation2 + $0x20] sm:$0xff]
    %v67 = vld [vmem:[#allocation2 + $0x28] sm:$0xff]
    %v68 = vld [vmem:[#allocation2 + $0x30] sm:$0xff]
    %v69 = vld [vmem:[#allocation2 + $0x38] sm:$0xff]
    %v70 = vld [vmem:[#allocation2 + $0x40] sm:$0xff]
    %v71 = vld [vmem:[#allocation2 + $0x48] sm:$0xff]
    %v72 = vld [vmem:[#allocation2 + $0x50] sm:$0xff]
    %v73 = vld [vmem:[#allocation2 + $0x58] sm:$0xff]
    %v74 = vld [vmem:[#allocation2 + $0x60] sm:$0xff]
    %v75 = vld [vmem:[#allocation2 + $0x68] sm:$0xff]
    %v76 = vld [vmem:[#allocation2 + $0x70] sm:$0xff]
    %v77 = vld [vmem:[#allocation2 + $0x78] sm:$0xff]
    %v78 = vlog2.pop %v46
    %v79 = vmul.f32 %v78, 0.6931472
    %v80 = vlog2.pop %v47
    %v81 = vmul.f32 %v80, 0.6931472
    %v82 = vlog2.pop %v48
    %v83 = vmul.f32 %v82, 0.6931472
    %v84 = vlog2.pop %v49
    %v85 = vmul.f32 %v84, 0.6931472
    %v86 = vlog2.pop %v50
    %v87 = vmul.f32 %v86, 0.6931472
    %v88 = vlog2.pop %v51
    %v89 = vmul.f32 %v88, 0.6931472
    %v90 = vlog2.pop %v52
    %v91 = vmul.f32 %v90, 0.6931472
    %v92 = vlog2.pop %v53
    %v93 = vmul.f32 %v92, 0.6931472
    %v94 = vlog2.pop %v54
    %v95 = vmul.f32 %v94, 0.6931472
    %v96 = vlog2.pop %v55
    %v97 = vmul.f32 %v96, 0.6931472
    %v98 = vlog2.pop %v56
    %v99 = vmul.f32 %v98, 0.6931472
    %v100 = vlog2.pop %v57
    %v101 = vmul.f32 %v100, 0.6931472
    %v102 = vlog2.pop %v58
    %v103 = vmul.f32 %v102, 0.6931472
    %v104 = vlog2.pop %v59
    %v105 = vmul.f32 %v104, 0.6931472
    %v106 = vlog2.pop %v60
    %v107 = vmul.f32 %v106, 0.6931472
    %v108 = vlog2.pop %v61
    %v109 = vmul.f32 %v108, 0.6931472
    %v110 = vmul.f32 %v46, %v79
    %v111 = vmul.f32 %v47, %v81
    %v112 = vmul.f32 %v48, %v83
    %v113 = vmul.f32 %v49, %v85
    %v114 = vmul.f32 %v50, %v87
    %v115 = vmul.f32 %v51, %v89
    %v116 = vmul.f32 %v52, %v91
    %v117 = vmul.f32 %v53, %v93
    %v118 = vmul.f32 %v54, %v95
    %v119 = vmul.f32 %v55, %v97
    %v120 = vmul.f32 %v56, %v99
    %v121 = vmul.f32 %v57, %v101
    %v122 = vmul.f32 %v58, %v103
    %v123 = vmul.f32 %v59, %v105
    %v124 = vmul.f32 %v60, %v107
    %v125 = vmul.f32 %v61, %v109
    %vm126 = vcmask 261120
    %v127 = vsel %vm126, %v110, 0.0
    %128 = vadd.xlane.f32.xlu0 %v127
    %v129 = vpop.xlane.xlu0 %128
    %v130 = vsel %vm126, %v111, 0.0
    %131 = vadd.xlane.f32.xlu0 %v130
    %v132 = vpop.xlane.xlu0 %131
    %v133 = vsel %vm126, %v112, 0.0
    %134 = vadd.xlane.f32.xlu0 %v133
    %v135 = vpop.xlane.xlu0 %134
    %v136 = vsel %vm126, %v113, 0.0
    %137 = vadd.xlane.f32.xlu0 %v136
    %v138 = vpop.xlane.xlu0 %137
    %v139 = vsel %vm126, %v114, 0.0
    %140 = vadd.xlane.f32.xlu0 %v139
    %v141 = vpop.xlane.xlu0 %140
    %v142 = vsel %vm126, %v115, 0.0
    %143 = vadd.xlane.f32.xlu0 %v142
    %v144 = vpop.xlane.xlu0 %143
    %v145 = vsel %vm126, %v116, 0.0
    %146 = vadd.xlane.f32.xlu0 %v145
    %v147 = vpop.xlane.xlu0 %146
    %v148 = vsel %vm126, %v117, 0.0
    %149 = vadd.xlane.f32.xlu0 %v148
    %v150 = vpop.xlane.xlu0 %149
    %v151 = vsel %vm126, %v118, 0.0
    %152 = vadd.xlane.f32.xlu0 %v151
    %v153 = vpop.xlane.xlu0 %152
    %v154 = vsel %vm126, %v119, 0.0
    %155 = vadd.xlane.f32.xlu0 %v154
    %v156 = vpop.xlane.xlu0 %155
    %v157 = vsel %vm126, %v120, 0.0
    %158 = vadd.xlane.f32.xlu0 %v157
    %v159 = vpop.xlane.xlu0 %158
    %v160 = vsel %vm126, %v121, 0.0
    %161 = vadd.xlane.f32.xlu0 %v160
    %v162 = vpop.xlane.xlu0 %161
    %v163 = vsel %vm126, %v122, 0.0
    %164 = vadd.xlane.f32.xlu0 %v163
    %v165 = vpop.xlane.xlu0 %164
    %v166 = vsel %vm126, %v123, 0.0
    %167 = vadd.xlane.f32.xlu0 %v166
    %v168 = vpop.xlane.xlu0 %167
    %v169 = vsel %vm126, %v124, 0.0
    %170 = vadd.xlane.f32.xlu0 %v169
    %v171 = vpop.xlane.xlu0 %170
    %v172 = vsel %vm126, %v125, 0.0
    %173 = vadd.xlane.f32.xlu0 %v172
    %v174 = vpop.xlane.xlu0 %173
    %v175 = vadd.f32 %v62, %v129
    %v176 = vadd.f32 %v63, %v132
    %v177 = vadd.f32 %v64, %v135
    %v178 = vadd.f32 %v65, %v138
    %v179 = vadd.f32 %v66, %v141
    %v180 = vadd.f32 %v67, %v144
    %v181 = vadd.f32 %v68, %v147
    %v182 = vadd.f32 %v69, %v150
    %v183 = vadd.f32 %v70, %v153
    %v184 = vadd.f32 %v71, %v156
    %v185 = vadd.f32 %v72, %v159
    %v186 = vadd.f32 %v73, %v162
    %v187 = vadd.f32 %v74, %v165
    %v188 = vadd.f32 %v75, %v168
    %v189 = vadd.f32 %v76, %v171
    %v190 = vadd.f32 %v77, %v174
    %vm191 = vcmask 7168
    %192 = vst.msk [vmem:[#allocation2] sm:$0xff] %vm191, %v175
    %193 = vst.msk [vmem:[#allocation2 + $0x8] sm:$0xff] %vm191, %v176
    %194 = vst.msk [vmem:[#allocation2 + $0x10] sm:$0xff] %vm191, %v177
    %195 = vst.msk [vmem:[#allocation2 + $0x18] sm:$0xff] %vm191, %v178
    %196 = vst.msk [vmem:[#allocation2 + $0x20] sm:$0xff] %vm191, %v179
    %197 = vst.msk [vmem:[#allocation2 + $0x28] sm:$0xff] %vm191, %v180
    %198 = vst.msk [vmem:[#allocation2 + $0x30] sm:$0xff] %vm191, %v181
    %199 = vst.msk [vmem:[#allocation2 + $0x38] sm:$0xff] %vm191, %v182
    %200 = vst.msk [vmem:[#allocation2 + $0x40] sm:$0xff] %vm191, %v183
    %201 = vst.msk [vmem:[#allocation2 + $0x48] sm:$0xff] %vm191, %v184
    %202 = vst.msk [vmem:[#allocation2 + $0x50] sm:$0xff] %vm191, %v185
    %203 = vst.msk [vmem:[#allocation2 + $0x58] sm:$0xff] %vm191, %v186
    %204 = vst.msk [vmem:[#allocation2 + $0x60] sm:$0xff] %vm191, %v187
    %205 = vst.msk [vmem:[#allocation2 + $0x68] sm:$0xff] %vm191, %v188
    %206 = vst.msk [vmem:[#allocation2 + $0x70] sm:$0xff] %vm191, %v189
    %207 = vst.msk [vmem:[#allocation2 + $0x78] sm:$0xff] %vm191, %v190
    // Predicated region
    $region14: #{tpu_custom_call.1} parent=1 // pred_check
      %p208 = pneg %p25
    $region15: #{tpu_custom_call.1} parent=1 // pred_check_branch
      %210 = sbr.rel (%p208) target = $region17
    $region16: #{tpu_custom_call.1} parent=1 // pred_region
      %v211 = vld [vmem:[#allocation2] sm:$0xff]
      %v212 = vld [vmem:[#allocation2 + $0x8] sm:$0xff]
      %v213 = vld [vmem:[#allocation2 + $0x10] sm:$0xff]
      %v214 = vld [vmem:[#allocation2 + $0x18] sm:$0xff]
      %v215 = vld [vmem:[#allocation2 + $0x20] sm:$0xff]
      %v216 = vld [vmem:[#allocation2 + $0x28] sm:$0xff]
      %v217 = vld [vmem:[#allocation2 + $0x30] sm:$0xff]
      %v218 = vld [vmem:[#allocation2 + $0x38] sm:$0xff]
      %v219 = vld [vmem:[#allocation2 + $0x40] sm:$0xff]
      %v220 = vld [vmem:[#allocation2 + $0x48] sm:$0xff]
      %v221 = vld [vmem:[#allocation2 + $0x50] sm:$0xff]
      %v222 = vld [vmem:[#allocation2 + $0x58] sm:$0xff]
      %v223 = vld [vmem:[#allocation2 + $0x60] sm:$0xff]
      %v224 = vld [vmem:[#allocation2 + $0x68] sm:$0xff]
      %v225 = vld [vmem:[#allocation2 + $0x70] sm:$0xff]
      %v226 = vld [vmem:[#allocation2 + $0x78] sm:$0xff]
      %v227 = vmul.f32 %v211, -1.442695
      %v228 = vmul.f32 %v212, -1.442695
      %v229 = vmul.f32 %v213, -1.442695
      %v230 = vmul.f32 %v214, -1.442695
      %v231 = vmul.f32 %v215, -1.442695
      %v232 = vmul.f32 %v216, -1.442695
      %v233 = vmul.f32 %v217, -1.442695
      %v234 = vmul.f32 %v218, -1.442695
      %v235 = vmul.f32 %v219, -1.442695
      %v236 = vmul.f32 %v220, -1.442695
      %v237 = vmul.f32 %v221, -1.442695
      %v238 = vmul.f32 %v222, -1.442695
      %v239 = vmul.f32 %v223, -1.442695
      %v240 = vmul.f32 %v224, -1.442695
      %v241 = vmul.f32 %v225, -1.442695
      %v242 = vmul.f32 %v226, -1.442695
      %v243 = vlaneseq
      %v244 = vshrl.u32 %v243, 7
      %v245 = vadd.s32 %v244, 8
      %v246 = vadd.s32 %v244, 16
      %v247 = vadd.s32 %v244, 24
      %v248 = vadd.s32 %v244, 32
      %v249 = vadd.s32 %v244, 40
      %v250 = vadd.s32 %v244, 48
      %v251 = vadd.s32 %v244, 56
      %v252 = vadd.s32 %v244, 64
      %v253 = vadd.s32 %v244, 72
      %v254 = vadd.s32 %v244, 80
      %v255 = vadd.s32 %v244, 88
      %v256 = vadd.s32 %v244, 96
      %v257 = vadd.s32 %v244, 104
      %v258 = vadd.s32 %v244, 112
      %v259 = vadd.s32 %v244, 120
      %v260 = vlaneseq
      %v261 = vand.u32 %v260, 127
      %vm262 = vcmp.eq.s32.totalorder %v244, %v261
      %vm263 = vcmp.eq.s32.totalorder %v245, %v261
      %vm264 = vcmp.eq.s32.totalorder %v246, %v261
      %vm265 = vcmp.eq.s32.totalorder %v247, %v261
      %vm266 = vcmp.eq.s32.totalorder %v248, %v261
      %vm267 = vcmp.eq.s32.totalorder %v249, %v261
      %vm268 = vcmp.eq.s32.totalorder %v250, %v261
      %vm269 = vcmp.eq.s32.totalorder %v251, %v261
      %vm270 = vcmp.eq.s32.totalorder %v252, %v261
      %vm271 = vcmp.eq.s32.totalorder %v253, %v261
      %vm272 = vcmp.eq.s32.totalorder %v254, %v261
      %vm273 = vcmp.eq.s32.totalorder %v255, %v261
      %vm274 = vcmp.eq.s32.totalorder %v256, %v261
      %vm275 = vcmp.eq.s32.totalorder %v257, %v261
      %vm276 = vcmp.eq.s32.totalorder %v258, %v261
      %vm277 = vcmp.eq.s32.totalorder %v259, %v261
      %279 = vset.pattern.permute.xlu0 0
      %280 = vperm.xlu0 %279, %v227
      %v281 = vpop.permute.xlu0 %280
      %284 = vset.pattern.permute.xlu0 0
      %285 = vperm.xlu0 %284, %v228
      %v286 = vpop.permute.xlu0 %285
      %289 = vset.pattern.permute.xlu0 0
      %290 = vperm.xlu0 %289, %v229
      %v291 = vpop.permute.xlu0 %290
      %294 = vset.pattern.permute.xlu0 0
      %295 = vperm.xlu0 %294, %v230
      %v296 = vpop.permute.xlu0 %295
      %299 = vset.pattern.permute.xlu0 0
      %300 = vperm.xlu0 %299, %v231
      %v301 = vpop.permute.xlu0 %300
      %304 = vset.pattern.permute.xlu0 0
      %305 = vperm.xlu0 %304, %v232
      %v306 = vpop.permute.xlu0 %305
      %309 = vset.pattern.permute.xlu0 0
      %310 = vperm.xlu0 %309, %v233
      %v311 = vpop.permute.xlu0 %310
      %314 = vset.pattern.permute.xlu0 0
      %315 = vperm.xlu0 %314, %v234
      %v316 = vpop.permute.xlu0 %315
      %319 = vset.pattern.permute.xlu0 0
      %320 = vperm.xlu0 %319, %v235
      %v321 = vpop.permute.xlu0 %320
      %324 = vset.pattern.permute.xlu0 0
      %325 = vperm.xlu0 %324, %v236
      %v326 = vpop.permute.xlu0 %325
      %329 = vset.pattern.permute.xlu0 0
      %330 = vperm.xlu0 %329, %v237
      %v331 = vpop.permute.xlu0 %330
      %334 = vset.pattern.permute.xlu0 0
      %335 = vperm.xlu0 %334, %v238
      %v336 = vpop.permute.xlu0 %335
      %339 = vset.pattern.permute.xlu0 0
      %340 = vperm.xlu0 %339, %v239
      %v341 = vpop.permute.xlu0 %340
      %344 = vset.pattern.permute.xlu0 0
      %345 = vperm.xlu0 %344, %v240
      %v346 = vpop.permute.xlu0 %345
      %349 = vset.pattern.permute.xlu0 0
      %350 = vperm.xlu0 %349, %v241
      %v351 = vpop.permute.xlu0 %350
      %354 = vset.pattern.permute.xlu0 0
      %355 = vperm.xlu0 %354, %v242
      %v356 = vpop.permute.xlu0 %355
      %v358 = vsel %vm262, %v281, 0.0
      %v359 = vsel %vm263, %v286, 0.0
      %v360 = vsel %vm264, %v291, 0.0
      %v361 = vsel %vm265, %v296, 0.0
      %v362 = vsel %vm266, %v301, 0.0
      %v363 = vsel %vm267, %v306, 0.0
      %v364 = vsel %vm268, %v311, 0.0
      %v365 = vsel %vm269, %v316, 0.0
      %v366 = vsel %vm270, %v321, 0.0
      %v367 = vsel %vm271, %v326, 0.0
      %v368 = vsel %vm272, %v331, 0.0
      %v369 = vsel %vm273, %v336, 0.0
      %v370 = vsel %vm274, %v341, 0.0
      %v371 = vsel %vm275, %v346, 0.0
      %v372 = vsel %vm276, %v351, 0.0
      %v373 = vsel %vm277, %v356, 0.0
      %v374 = vadd.f32 %v358, %v359
      %v375 = vadd.f32 %v374, %v360
      %v376 = vadd.f32 %v375, %v361
      %v377 = vadd.f32 %v376, %v362
      %v378 = vadd.f32 %v377, %v363
      %v379 = vadd.f32 %v378, %v364
      %v380 = vadd.f32 %v379, %v365
      %v381 = vadd.f32 %v380, %v366
      %v382 = vadd.f32 %v381, %v367
      %v383 = vadd.f32 %v382, %v368
      %v384 = vadd.f32 %v383, %v369
      %v385 = vadd.f32 %v384, %v370
      %v386 = vadd.f32 %v385, %v371
      %v387 = vadd.f32 %v386, %v372
      %v388 = vadd.f32 %v387, %v373
      %v389 = vrot.slane %v388, 4
      %v390 = vadd.f32 %v388, %v389
      %v391 = vrot.slane %v390, 2
      %v392 = vadd.f32 %v390, %v391
      %v393 = vrot.slane %v392, 1
      %v394 = vadd.f32 %v392, %v393
      %395 = vst [vmem:[#allocation6] sm:$0x1] %v394
    $region17: #{tpu_custom_call.1} parent=1 // pred_fallthru
      _
    // Predicated region
    $region18: #{tpu_custom_call.1} parent=1 // pred_check
      _
    $region19: #{tpu_custom_call.1} parent=1 // pred_check_branch
      %397 = sbr.rel (0) target = $region21
    $region20: #{tpu_custom_call.1} parent=1 // pred_region
      %399 = vsyncadd [#allocation5], 0
      %s401 = sshll.u32 [#allocation6], 4
      %s402 = int_to_ptr.vmem [resolvable:$true] %s401
      %s403 = sshll.u32 %s1, 4
      %s404 = int_to_ptr.hbm [resolvable:$true] %s403
      %406 = dma.vmem_to_hbm [thread:$0]  %s402, 16, %s404, [#allocation5]
    $region21: #{tpu_custom_call.1} parent=1 // pred_fallthru
      _
    // Predicated region
    $region22: #{tpu_custom_call.1} parent=1 // pred_check
      _
    $region23: #{tpu_custom_call.1} parent=1 // pred_check_branch
      %408 = sbr.rel (0) target = $region25
    $region24: #{tpu_custom_call.1} parent=1 // pred_region
      %410 = dma.done [#allocation5], 16
    $region25: #{tpu_custom_call.1} parent=1 // pred_fallthru
      _
    %411 = vsyncpa [#allocation4], 1
    %412 = vsyncpa [#allocation5], 1

</llo_original>
